<compile_context>
chip_gen: v5e
topology: v5e:2x2
jax: 0.10.0
libtpu: 0.0.40
codegen_flags: <defaults>
</compile_context>

<pallas_src>
import functools

import jax
import jax.numpy as jnp
import numpy as np
from jax.experimental import pallas as pl
from jax.experimental.pallas import tpu as pltpu


# ----------------------------------------------------------------------------
# Parameter init (deterministic) — matches create_sinusoidal_embeddings
# ----------------------------------------------------------------------------
def create_sinusoidal_embeddings(n_pos: int, dim: int) -> jnp.ndarray:
    position_enc = np.array(
        [[pos / np.power(10000, 2 * (j // 2) / dim) for j in range(dim)]
         for pos in range(n_pos)],
        dtype=np.float64,
    )
    out = np.zeros((n_pos, dim), dtype=np.float32)
    out[:, 0::2] = np.sin(position_enc[:, 0::2]).astype(np.float32)
    out[:, 1::2] = np.cos(position_enc[:, 1::2]).astype(np.float32)
    return jnp.asarray(out)


# ----------------------------------------------------------------------------
# Tiling helper
# ----------------------------------------------------------------------------
def _choose_seq_tile(seq_len: int, bytes_per_row: int,
                     budget_bytes: int = 4 << 20, sublane: int = 8) -> int:
    """Pick a sequence tile TF that:
       (a) divides seq_len,
       (b) is a multiple of `sublane` (or equals seq_len, i.e. full extent),
       (c) keeps one (B, TF, D) block under `budget_bytes`,
       (d) prefers >= 2 grid steps so v7x's two TensorCores can both stream.
    Falls back to the smallest legal divisor if nothing fits the budget
    (caller then raises vmem_limit_bytes)."""
    best = None
    for tf in range(seq_len, 0, -1):
        if seq_len % tf:
            continue
        if tf != seq_len and tf % sublane:
            continue
        if tf * bytes_per_row > budget_bytes:
            continue
        if best is None:
            best = tf
        if seq_len // tf >= 2:
            return tf               # largest in-budget tile with >= 2 steps
    if best is not None:
        return best                 # single step, but fits the budget
    # Nothing fits: take the smallest legal divisor; caller bumps vmem limit.
    for tf in range(sublane, seq_len + 1):
        if seq_len % tf == 0 and tf % sublane == 0:
            return tf
    return seq_len                  # full extent is always layout-legal


# ----------------------------------------------------------------------------
# Fused kernel: (x + pos + modality) -> LayerNorm
# ----------------------------------------------------------------------------
def _embeddings_kernel(x_ref, bias_ref, gamma_ref, beta_ref, o_ref, *, eps):
    # x_ref:     (B, TF, D)  input embeddings tile
    # bias_ref:  (TF, D)     position + modality rows for this tile
    # gamma_ref: (1, D)      LayerNorm weight
    # beta_ref:  (1, D)      LayerNorm bias
    # o_ref:     (B, TF, D)
    x = x_ref[...] + bias_ref[...][None, :, :]
    mean = jnp.mean(x, axis=-1, keepdims=True)
    xc = x - mean
    var = jnp.mean(xc * xc, axis=-1, keepdims=True)
    y = xc * jax.lax.rsqrt(var + eps)          # rsqrt -> EUP slot (free-ish)
    o_ref[...] = y * gamma_ref[...] + beta_ref[...]


# ----------------------------------------------------------------------------
# Module wrapper (JAX port of mist Embeddings; dropout = identity, inference)
# ----------------------------------------------------------------------------
class Embeddings:
    def __init__(self, d_model, language_len, vision_len, dropout,
                 sinusoidal_pos_embds, key=None):
        del dropout  # TODO(synk): train-mode dropout not implemented (inference identity)
        self.d_model = d_model
        self.language_len = language_len
        self.vision_len = vision_len
        self.max_position_embeddings = language_len + vision_len
        self.eps = 1e-12

        if key is None:
            key = jax.random.PRNGKey(0)
        k_pos, k_mod = jax.random.split(key)

        if sinusoidal_pos_embds:
            self.position_weight = create_sinusoidal_embeddings(
                self.max_position_embeddings, d_model)
        else:
            self.position_weight = 0.02 * jax.random.normal(
                k_pos, (self.max_position_embeddings, d_model), jnp.float32)
        # modality_embedding: nn.Embedding(2, d_model), re-init N(0, 0.02) by ISTA
        self.modality_weight = 0.02 * jax.random.normal(
            k_mod, (2, d_model), jnp.float32)
        # LayerNorm params (ISTA._init_weights: weight=1, bias=0)
        self.ln_weight = jnp.ones((d_model,), jnp.float32)
        self.ln_bias = jnp.zeros((d_model,), jnp.float32)
        self._refresh_bias_table()

    def _refresh_bias_table(self):
        # Per-position additive bias = position row + modality row
        # (modality index 0 for the first language_len positions, 1 after).
        mod_ids = jnp.concatenate([
            jnp.zeros((self.language_len,), jnp.int32),
            jnp.ones((self.vision_len,), jnp.int32)])
        self.bias_table = self.position_weight + self.modality_weight[mod_ids]

    def __call__(self, embeddings: jnp.ndarray) -> jnp.ndarray:
        assert embeddings.ndim == 3, "Embeddings.forward expects (B, S, D)"
        bsize, seq_len, d = embeddings.shape
        assert d == self.d_model
        assert seq_len <= self.max_position_embeddings

        x = embeddings.astype(jnp.float32)
        bias = self.bias_table[:seq_len]                      # (S, D)
        gamma = self.ln_weight.reshape(1, d).astype(jnp.float32)
        beta = self.ln_bias.reshape(1, d).astype(jnp.float32)

        tf = _choose_seq_tile(seq_len, bsize * d * 4)
        grid = (pl.cdiv(seq_len, tf),)

        # Scoped-VMEM budget check: double-buffered in + out blocks + bias tile.
        block_bytes = bsize * tf * d * 4
        bias_bytes = tf * d * 4
        needed = 2 * (2 * block_bytes + bias_bytes) + 4 * d * 4 + (1 << 20)
        cp_kwargs = dict(dimension_semantics=("parallel",))
        if needed > (32 << 20):
            # Only raise above the default when required; cap under v7x's 64 MiB.
            cp_kwargs["vmem_limit_bytes"] = int(min(needed, 60 << 20))

        io_bytes = (2 * bsize * seq_len * d + seq_len * d + 2 * d) * 4
        out = pl.pallas_call(
            functools.partial(_embeddings_kernel, eps=self.eps),
            out_shape=jax.ShapeDtypeStruct((bsize, seq_len, d), jnp.float32),
            grid_spec=pl.GridSpec(
                grid=grid,
                in_specs=[
                    pl.BlockSpec((bsize, tf, d), lambda f: (0, f, 0)),  # x tile
                    pl.BlockSpec((tf, d), lambda f: (f, 0)),            # bias tile
                    pl.BlockSpec((1, d), lambda f: (0, 0)),             # gamma (resident)
                    pl.BlockSpec((1, d), lambda f: (0, 0)),             # beta  (resident)
                ],
                out_specs=pl.BlockSpec((bsize, tf, d), lambda f: (0, f, 0)),
            ),
            compiler_params=pltpu.CompilerParams(**cp_kwargs),
            cost_estimate=pl.CostEstimate(
                flops=8 * bsize * seq_len * d,
                transcendentals=bsize * seq_len,
                bytes_accessed=io_bytes),
        )(x, bias, gamma, beta)
        return out


# ----------------------------------------------------------------------------
# Pure-JAX reference for verification
# ----------------------------------------------------------------------------
def _reference(module: Embeddings, x: jnp.ndarray) -> jnp.ndarray:
    bias = module.bias_table[: x.shape[1]]
    h = x + bias[None, :, :]
    mean = h.mean(-1, keepdims=True)
    var = jnp.mean((h - mean) ** 2, axis=-1, keepdims=True)
    y = (h - mean) / jnp.sqrt(var + module.eps)
    return y * module.ln_weight + module.ln_bias


if __name__ == "__main__":
    key = jax.random.PRNGKey(0)
    k_mod, k_g, k_b, k_x1, k_x2 = jax.random.split(key, 5)

    d_model = 128                       # multiple of 128 -> lane-dense blocks

    # Case 1: seq = language_len + vision_len = 32 -> tf = 16, grid = (2,)
    m1 = Embeddings(d_model=d_model, language_len=8, vision_len=24,
                    dropout=0.1, sinusoidal_pos_embds=True, key=k_mod)
    # Non-trivial LayerNorm params so the affine path is exercised.
    m1.ln_weight = 1.0 + 0.05 * jax.random.normal(k_g, (d_model,), jnp.float32)
    m1.ln_bias = 0.05 * jax.random.normal(k_b, (d_model,), jnp.float32)

    x1 = jax.random.normal(k_x1, (2, 32, d_model), dtype=jnp.float32)
    out1 = jax.block_until_ready(m1(x1))
    ref1 = _reference(m1, x1)
    np.testing.assert_allclose(np.asarray(out1), np.asarray(ref1),
                               rtol=1e-4, atol=1e-4)

    # Case 2: seq not a multiple of 8 -> single full-extent tile path.
    m2 = Embeddings(d_model=d_model, language_len=4, vision_len=6,
                    dropout=0.1, sinusoidal_pos_embds=True, key=k_mod)
    x2 = jax.random.normal(k_x2, (2, 10, d_model), dtype=jnp.float32)
    out2 = jax.block_until_ready(m2(x2))
    ref2 = _reference(m2, x2)
    np.testing.assert_allclose(np.asarray(out2), np.asarray(ref2),
                               rtol=1e-4, atol=1e-4)

    print("KERNEL_OK")
</pallas_src>

<mosaic_0001>
module attributes {stable_mosaic.version = 11 : i64} {
  func.func @_embeddings_kernel(%arg0: i32, %arg1: memref<2x16x128xf32, #tpu.memory_space<vmem>>, %arg2: memref<16x128xf32, #tpu.memory_space<vmem>>, %arg3: memref<1x128xf32, #tpu.memory_space<vmem>>, %arg4: memref<1x128xf32, #tpu.memory_space<vmem>>, %arg5: memref<2x16x128xf32, #tpu.memory_space<vmem>>) attributes {dimension_semantics = [#tpu.dimension_semantics<parallel>], iteration_bounds = array<i64: 2>, scalar_prefetch = 0 : i64, scratch_operands = 0 : i64, tpu.core_type = #tpu.core_type<tc>, window_params = [{transform_indices = @transform_0, window_bounds = array<i64: 2, 16, 128>}, {transform_indices = @transform_1, window_bounds = array<i64: 16, 128>}, {pipeline_mode = #tpu.pipeline_mode<synchronous>, transform_indices = @transform_2, window_bounds = array<i64: 1, 128>}, {pipeline_mode = #tpu.pipeline_mode<synchronous>, transform_indices = @transform_3, window_bounds = array<i64: 1, 128>}, {transform_indices = @transform_4, window_bounds = array<i64: 2, 16, 128>}]} {
    %c0 = arith.constant 0 : index
    %c0_0 = arith.constant 0 : index
    %c0_1 = arith.constant 0 : index
    %0 = vector.load %arg1[%c0, %c0_0, %c0_1] : memref<2x16x128xf32, #tpu.memory_space<vmem>>, vector<2x16x128xf32>
    %c0_2 = arith.constant 0 : index
    %c0_3 = arith.constant 0 : index
    %1 = vector.load %arg2[%c0_2, %c0_3] : memref<16x128xf32, #tpu.memory_space<vmem>>, vector<16x128xf32>
    %2 = vector.shape_cast %1 : vector<16x128xf32> to vector<1x16x128xf32>
    %3 = vector.broadcast %2 : vector<1x16x128xf32> to vector<2x16x128xf32>
    %4 = arith.addf %0, %3 : vector<2x16x128xf32>
    %cst = arith.constant dense<0.000000e+00> : vector<2x16xf32>
    %5 = vector.multi_reduction <add>, %4, %cst [2] : vector<2x16x128xf32> to vector<2x16xf32>
    %6 = vector.shape_cast %5 : vector<2x16xf32> to vector<2x16x1xf32>
    %cst_4 = arith.constant 1.280000e+02 : f32
    %7 = vector.broadcast %cst_4 : f32 to vector<2x16x1xf32>
    %8 = arith.divf %6, %7 : vector<2x16x1xf32>
    %9 = vector.broadcast %8 : vector<2x16x1xf32> to vector<2x16x128xf32>
    %10 = arith.subf %4, %9 : vector<2x16x128xf32>
    %11 = arith.mulf %10, %10 : vector<2x16x128xf32>
    %cst_5 = arith.constant dense<0.000000e+00> : vector<2x16xf32>
    %12 = vector.multi_reduction <add>, %11, %cst_5 [2] : vector<2x16x128xf32> to vector<2x16xf32>
    %13 = vector.shape_cast %12 : vector<2x16xf32> to vector<2x16x1xf32>
    %cst_6 = arith.constant 1.280000e+02 : f32
    %14 = vector.broadcast %cst_6 : f32 to vector<2x16x1xf32>
    %15 = arith.divf %13, %14 : vector<2x16x1xf32>
    %cst_7 = arith.constant 9.99999996E-13 : f32
    %16 = vector.broadcast %cst_7 : f32 to vector<2x16x1xf32>
    %17 = arith.addf %15, %16 : vector<2x16x1xf32>
    %18 = math.rsqrt %17 : vector<2x16x1xf32>
    %19 = vector.broadcast %18 : vector<2x16x1xf32> to vector<2x16x128xf32>
    %20 = arith.mulf %10, %19 : vector<2x16x128xf32>
    %c0_8 = arith.constant 0 : index
    %c0_9 = arith.constant 0 : index
    %21 = vector.load %arg3[%c0_8, %c0_9] : memref<1x128xf32, #tpu.memory_space<vmem>>, vector<1x128xf32>
    %22 = vector.shape_cast %21 : vector<1x128xf32> to vector<1x1x128xf32>
    %23 = vector.broadcast %22 : vector<1x1x128xf32> to vector<2x16x128xf32>
    %24 = arith.mulf %20, %23 : vector<2x16x128xf32>
    %c0_10 = arith.constant 0 : index
    %c0_11 = arith.constant 0 : index
    %25 = vector.load %arg4[%c0_10, %c0_11] : memref<1x128xf32, #tpu.memory_space<vmem>>, vector<1x128xf32>
    %26 = vector.shape_cast %25 : vector<1x128xf32> to vector<1x1x128xf32>
    %27 = vector.broadcast %26 : vector<1x1x128xf32> to vector<2x16x128xf32>
    %28 = arith.addf %24, %27 : vector<2x16x128xf32>
    %c0_12 = arith.constant 0 : index
    %c0_13 = arith.constant 0 : index
    %c0_14 = arith.constant 0 : index
    %29 = vector.load %arg5[%c0_12, %c0_13, %c0_14] : memref<2x16x128xf32, #tpu.memory_space<vmem>>, vector<2x16x128xf32>
    tpu.vector_store %arg5[%c0_12, %c0_13, %c0_14], %28 {strides = array<i32>} : memref<2x16x128xf32, #tpu.memory_space<vmem>>, vector<2x16x128xf32>,
    return
  }
  func.func @transform_0(%arg0: i32) -> (i32, i32, i32) {
    %c0_i32 = arith.constant 0 : i32
    %c0_i32_0 = arith.constant 0 : i32
    %c0_i32_1 = arith.constant 0 : i32
    return %c0_i32, %arg0, %c0_i32_0 : i32, i32, i32
  }
  func.func @transform_1(%arg0: i32) -> (i32, i32) {
    %c0_i32 = arith.constant 0 : i32
    %c0_i32_0 = arith.constant 0 : i32
    return %arg0, %c0_i32 : i32, i32
  }
  func.func @transform_2(%arg0: i32) -> (i32, i32) {
    %c0_i32 = arith.constant 0 : i32
    %c0_i32_0 = arith.constant 0 : i32
    %c0_i32_1 = arith.constant 0 : i32
    return %c0_i32, %c0_i32_0 : i32, i32
  }
  func.func @transform_3(%arg0: i32) -> (i32, i32) {
    %c0_i32 = arith.constant 0 : i32
    %c0_i32_0 = arith.constant 0 : i32
    %c0_i32_1 = arith.constant 0 : i32
    return %c0_i32, %c0_i32_0 : i32, i32
  }
  func.func @transform_4(%arg0: i32) -> (i32, i32, i32) {
    %c0_i32 = arith.constant 0 : i32
    %c0_i32_0 = arith.constant 0 : i32
    %c0_i32_1 = arith.constant 0 : i32
    return %c0_i32, %arg0, %c0_i32_0 : i32, i32, i32
  }
}

</mosaic_0001>

<llo_original>
// kernel: tpu_custom_call.1
$region0: #{tpu_custom_call.1}
  #allocation0 [shape = 'u32[]', space=smem, size = 0x4, offset = 0x4, fixed_abs, tag = 'smem constant byte address 0x4 - core index']
  #allocation1 [shape = 'u32[72,128]{1,0:T(1,128)}', space=vmem, size = 0x9000, scoped, tag = 'internal scratch']
  #allocation8 [shape = 's32[]', space=sflag, size = 0x4, offset = 0, fixed_abs, tag = 'sflag constant byte address 0x0 - dummy sync flag']
  #allocation10 [shape = 's32[]', space=sflag, size = 0x4, offset = 0, fixed_abs, tag = 'sflag constant byte address 0x0 - dummy sync flag']
  %s0 = inlined_call_operand.hbm [shape: f32[2,32,128], index: 0, kind: input, shape index: {}]
  %s1 = inlined_call_operand.hbm [shape: f32[32,128], index: 1, kind: input, shape index: {}]
  %s2 = inlined_call_operand.vmem [shape: f32[1,128], index: 2, kind: input, shape index: {}]
  %s3 = inlined_call_operand.vmem [shape: f32[1,128], index: 3, kind: input, shape index: {}]
  %s4 = inlined_call_operand.hbm [shape: f32[2,32,128], index: 4, kind: output, shape index: {}]
  %s5 = sld [smem:[#allocation0]]
  $region57: #{tpu_custom_call.1} parent=0
    _
  %s7 = ssub.s32 1, %s5
  %s8 = scalar_select 0, %s7, %s5
  $region1: #{tpu_custom_call.1} parent=0
    #allocation2 [shape = 'u8[32768]{0}', space=vmem, size = 0x8000, scoped, tag = 'input window, operand 0']
    #allocation3 [shape = 's32[2]{0}', space=sflag, size = 0x8, scoped, tag = 'scoped memory for tpu_custom_call.1']
    #allocation4 [shape = 's32[2]{0}', space=sflag, size = 0x8, scoped, tag = 'scoped memory for tpu_custom_call.1']
    #allocation5 [shape = 'u8[16384]{0}', space=vmem, size = 0x4000, scoped, tag = 'input window, operand 1']
    #allocation6 [shape = 's32[2]{0}', space=sflag, size = 0x8, scoped, tag = 'scoped memory for tpu_custom_call.1']
    #allocation7 [shape = 'u8[32768]{0}', space=vmem, size = 0x8000, scoped, tag = 'output window, operand 0']
    %9 = vsyncpa [#allocation3], 0
    %s10 = scalar_lea.sflag [#allocation3], 1
    %11 = vsyncpa %s10, 0
    %12 = vsyncpa [#allocation6], 0
    %s13 = scalar_lea.sflag [#allocation6], 1
    %14 = vsyncpa %s13, 0
    %15 = vsyncpa [#allocation4], 0
    %s16 = scalar_lea.sflag [#allocation4], 1
    %17 = vsyncpa %s16, 0
    loop: start=0, step=1, limit=4
    $region2: #{tpu_custom_call.1} parent=1 // loop_pre_header
      _
    $region3: #{tpu_custom_call.1} parent=1 // loop_header
      %s19 = sphi 0, %s23
      %p20 = scmp.ge.s32.totalorder %s19, 4
      %s29 = sphi 0, %s31
      %s32 = sphi 0, %s29
      %s33 = sphi 0, %s32
      %s49 = sphi 0, %s33
      %s55 = sphi 0, %s57
      %s58 = sphi 0, %s55
      %s59 = sphi 0, %s58
      %s75 = sphi 0, %s59
      %s79 = sphi 0, %s79
      %s81 = sphi 0, %s79
      %s82 = sphi 0, %s81
      %s96 = sphi 0, %s82
      %s100 = sphi 0, %s100
      %s102 = sphi 0, %s100
      %s103 = sphi 0, %s102
      %s117 = sphi 0, %s103
      %s123 = sphi 0, %s125
      %s126 = sphi 0, %s123
      %s127 = sphi 0, %s126
      %s143 = sphi 0, %s127
    $region4: #{tpu_custom_call.1} parent=1 // loop_header_branch
      %22 = sbr.rel (%p20) target = $region8
    $region5: #{tpu_custom_call.1} parent=1 // loop_body
      %s24 = ssub.s32 %s19, 1
      %s25 = ssub.s32 %s19, 2
      %s26 = sadd.s32 %s19, 1
      %s27 = ssub.s32 %s19, %s26
      %p28 = scmp.eq.s32.totalorder %s27, 0
      %s30 = sadd.s32 %s29, 1
      %s31 = scalar_select %p28, %s29, %s30
      %p34 = pneg %p28
      %p35 = scmp.eq.s32.totalorder %s19, 1
      %p36 = por %p34, %p35
      %p37 = scmp.ne.s32.totalorder %s29, %s32
      %p38 = scmp.eq.s32.totalorder %s19, 0
      %p39 = por %p37, %p38
      %p40 = scmp.ne.s32.totalorder %s29, %s32
      %p41 = scmp.eq.s32.totalorder %s24, 1
      %p42 = por %p40, %p41
      %p43 = scmp.ne.s32.totalorder %s32, %s33
      %p44 = scmp.eq.s32.totalorder %s24, 0
      %p45 = por %p43, %p44
      %p46 = scmp.ne.s32.totalorder %s32, %s33
      %p47 = scmp.eq.s32.totalorder %s25, 1
      %p48 = por %p46, %p47
      %p50 = scmp.ne.s32.totalorder %s33, %s49
      %p51 = scmp.eq.s32.totalorder %s25, 0
      %p52 = por %p50, %p51
      %s53 = ssub.s32 %s19, %s26
      %p54 = scmp.eq.s32.totalorder %s53, 0
      %s56 = sadd.s32 %s55, 1
      %s57 = scalar_select %p54, %s55, %s56
      %p60 = pneg %p54
      %p61 = scmp.eq.s32.totalorder %s19, 1
      %p62 = por %p60, %p61
      %p63 = scmp.ne.s32.totalorder %s55, %s58
      %p64 = scmp.eq.s32.totalorder %s19, 0
      %p65 = por %p63, %p64
      %p66 = scmp.ne.s32.totalorder %s55, %s58
      %p67 = scmp.eq.s32.totalorder %s24, 1
      %p68 = por %p66, %p67
      %p69 = scmp.ne.s32.totalorder %s58, %s59
      %p70 = scmp.eq.s32.totalorder %s24, 0
      %p71 = por %p69, %p70
      %p72 = scmp.ne.s32.totalorder %s58, %s59
      %p73 = scmp.eq.s32.totalorder %s25, 1
      %p74 = por %p72, %p73
      %p76 = scmp.ne.s32.totalorder %s59, %s75
      %p77 = scmp.eq.s32.totalorder %s25, 0
      %p78 = por %p76, %p77
      %s80 = sadd.s32 %s79, 1
      %p83 = scmp.eq.s32.totalorder %s19, 1
      %p84 = scmp.ne.s32.totalorder %s79, %s81
      %p85 = scmp.eq.s32.totalorder %s19, 0
      %p86 = por %p84, %p85
      %p87 = scmp.ne.s32.totalorder %s79, %s81
      %p88 = scmp.eq.s32.totalorder %s24, 1
      %p89 = por %p87, %p88
      %p90 = scmp.ne.s32.totalorder %s81, %s82
      %p91 = scmp.eq.s32.totalorder %s24, 0
      %p92 = por %p90, %p91
      %p93 = scmp.ne.s32.totalorder %s81, %s82
      %p94 = scmp.eq.s32.totalorder %s25, 1
      %p95 = por %p93, %p94
      %p97 = scmp.ne.s32.totalorder %s82, %s96
      %p98 = scmp.eq.s32.totalorder %s25, 0
      %p99 = por %p97, %p98
      %s101 = sadd.s32 %s100, 1
      %p104 = scmp.eq.s32.totalorder %s19, 1
      %p105 = scmp.ne.s32.totalorder %s100, %s102
      %p106 = scmp.eq.s32.totalorder %s19, 0
      %p107 = por %p105, %p106
      %p108 = scmp.ne.s32.totalorder %s100, %s102
      %p109 = scmp.eq.s32.totalorder %s24, 1
      %p110 = por %p108, %p109
      %p111 = scmp.ne.s32.totalorder %s102, %s103
      %p112 = scmp.eq.s32.totalorder %s24, 0
      %p113 = por %p111, %p112
      %p114 = scmp.ne.s32.totalorder %s102, %s103
      %p115 = scmp.eq.s32.totalorder %s25, 1
      %p116 = por %p114, %p115
      %p118 = scmp.ne.s32.totalorder %s103, %s117
      %p119 = scmp.eq.s32.totalorder %s25, 0
      %p120 = por %p118, %p119
      %s121 = ssub.s32 %s19, %s26
      %p122 = scmp.eq.s32.totalorder %s121, 0
      %s124 = sadd.s32 %s123, 1
      %s125 = scalar_select %p122, %s123, %s124
      %p128 = pneg %p122
      %p129 = scmp.eq.s32.totalorder %s19, 1
      %p130 = por %p128, %p129
      %p131 = scmp.ne.s32.totalorder %s123, %s126
      %p132 = scmp.eq.s32.totalorder %s19, 0
      %p133 = por %p131, %p132
      %p134 = scmp.ne.s32.totalorder %s123, %s126
      %p135 = scmp.eq.s32.totalorder %s24, 1
      %p136 = por %p134, %p135
      %p137 = scmp.ne.s32.totalorder %s126, %s127
      %p138 = scmp.eq.s32.totalorder %s24, 0
      %p139 = por %p137, %p138
      %p140 = scmp.ne.s32.totalorder %s126, %s127
      %p141 = scmp.eq.s32.totalorder %s25, 1
      %p142 = por %p140, %p141
      %p144 = scmp.ne.s32.totalorder %s127, %s143
      %p145 = scmp.eq.s32.totalorder %s25, 0
      %p146 = por %p144, %p145
      %p147 = scmp.le.s32.totalorder 1, %s19
      %p148 = scmp.lt.s32.totalorder %s19, 3
      %p149 = pnand %p147, %p148
      %p150 = pneg %p149
      // Predicated region
      $region9: #{tpu_custom_call.1} parent=5 // pred_check
        _
      $region10: #{tpu_custom_call.1} parent=5 // pred_check_branch
        %152 = sbr.rel (%p149) target = $region12
      $region11: #{tpu_custom_call.1} parent=5 // pred_region
        %s153 = ssub.s32 %s19, 1
        // Predicated region
        $region13: #{tpu_custom_call.1} parent=11 // pred_check
          %p154 = pneg %p92
        $region14: #{tpu_custom_call.1} parent=11 // pred_check_branch
          %156 = sbr.rel (%p154) target = $region16
        $region15: #{tpu_custom_call.1} parent=11 // pred_region
          _
        $region16: #{tpu_custom_call.1} parent=11 // pred_fallthru
          _
        // Predicated region
        $region17: #{tpu_custom_call.1} parent=11 // pred_check
          %p157 = pneg %p113
        $region18: #{tpu_custom_call.1} parent=11 // pred_check_branch
          %159 = sbr.rel (%p157) target = $region20
        $region19: #{tpu_custom_call.1} parent=11 // pred_region
          _
        $region20: #{tpu_custom_call.1} parent=11 // pred_fallthru
          _
      $region12: #{tpu_custom_call.1} parent=5 // pred_fallthru
        _
      %p160 = scmp.lt.s32.totalorder %s19, 2
      // Predicated region
      $region21: #{tpu_custom_call.1} parent=5 // pred_check
        %p161 = pneg %p160
      $region22: #{tpu_custom_call.1} parent=5 // pred_check_branch
        %163 = sbr.rel (%p161) target = $region24
      $region23: #{tpu_custom_call.1} parent=5 // pred_region
        // Predicated region
        $region25: #{tpu_custom_call.1} parent=23 // pred_check
          %p164 = pneg %p39
        $region26: #{tpu_custom_call.1} parent=23 // pred_check_branch
          %166 = sbr.rel (%p164) target = $region28
        $region27: #{tpu_custom_call.1} parent=23 // pred_region
          #allocation9 [shape = 'u32[6]{0}', space=smem, size = 0x18, scoped, tag = 'DMA stride descriptor']
          %s167 = sand.u32 %s29, 1
          %s168 = scalar_lea.sflag [#allocation3], %s167
          %s169 = sand.u32 %s29, 1
          %s170 = smul.addr %s169, 32
          %s171 = scalar_lea.vmem [#allocation2], %s170
          %s172 = smul.u32 2, %s19
          %174 = vsyncadd %s168, 0
          %s175 = smul.addr %s172, 8
          %s176 = scalar_lea.hbm %s0, %s175
          %s178 = sshll.u32 1, 14
          %s179 = sxor.u32 4294967295, %s178
          %s181 = sld [smem:[#allocation0]]
          %s182 = sadd.s32 2, %s181
          %s184 = sshll.u32 7, 26
          %s185 = sxor.u32 4294967295, %s184
          %s186 = sand.u32 0, %s185
          %s187 = sshll.u32 %s182, 26
          %s188 = sor.u32 %s186, %s187
          %s189 = sshll.u32 %s176, 4
          %s190 = int_to_ptr.hbm [resolvable:$true] %s189
          %s191 = sshll.u32 %s171, 4
          %s192 = int_to_ptr.vmem [resolvable:$true] %s191
          %198 = sst [smem:[#allocation9]] 512
          %s199 = scalar_lea.smem [#allocation9], 1
          %200 = sst [smem:[%s199]] 256
          %s201 = scalar_lea.smem [#allocation9], 2
          %202 = sst [smem:[%s201]] 2
          %s203 = scalar_lea.smem [#allocation9], 3
          %204 = sst [smem:[%s203]] 128
          %s205 = scalar_lea.smem [#allocation9], 4
          %206 = sst [smem:[%s205]] 128
          %s207 = scalar_lea.smem [#allocation9], 5
          %208 = sst [smem:[%s207]] 8
          %210 = dma.general %s190, 512, %s192, %s168, [#allocation8], [#allocation9], %s188, 0
        $region28: #{tpu_custom_call.1} parent=23 // pred_fallthru
          _
        // Predicated region
        $region29: #{tpu_custom_call.1} parent=23 // pred_check
          %p211 = pneg %p65
        $region30: #{tpu_custom_call.1} parent=23 // pred_check_branch
          %213 = sbr.rel (%p211) target = $region32
        $region31: #{tpu_custom_call.1} parent=23 // pred_region
          %s214 = sand.u32 %s55, 1
          %s215 = scalar_lea.sflag [#allocation6], %s214
          %s216 = sand.u32 %s55, 1
          %s217 = smul.addr %s216, 16
          %s218 = scalar_lea.vmem [#allocation5], %s217
          %s219 = smul.u32 2, %s19
          %221 = vsyncadd %s215, 0
          %s222 = smul.addr %s219, 8
          %s223 = scalar_lea.hbm %s1, %s222
          %s224 = sshll.u32 %s223, 4
          %s225 = int_to_ptr.hbm [resolvable:$true] %s224
          %s226 = sshll.u32 %s218, 4
          %s227 = int_to_ptr.vmem [resolvable:$true] %s226
          %232 = dma.hbm_to_vmem [thread:$0]  %s225, 256, %s227, %s215, 128, 128, 8
        $region32: #{tpu_custom_call.1} parent=23 // pred_fallthru
          _
      $region24: #{tpu_custom_call.1} parent=5 // pred_fallthru
        _
      %p233 = scmp.le.s32.totalorder 1, %s19
      %p234 = scmp.lt.s32.totalorder %s19, 3
      %p235 = pnand %p233, %p234
      %p236 = pneg %p235
      // Predicated region
      $region33: #{tpu_custom_call.1} parent=5 // pred_check
        _
      $region34: #{tpu_custom_call.1} parent=5 // pred_check_branch
        %238 = sbr.rel (%p235) target = $region36
      $region35: #{tpu_custom_call.1} parent=5 // pred_region
        %s239 = ssub.s32 %s19, 1
        %s240 = sand.u32 %s32, 1
        %s241 = scalar_lea.sflag [#allocation3], %s240
        %s242 = sand.u32 %s32, 1
        %s243 = smul.addr %s242, 32
        %s244 = scalar_lea.vmem [#allocation2], %s243
        // Predicated region
        $region37: #{tpu_custom_call.1} parent=35 // pred_check
          %p245 = pneg %p45
        $region38: #{tpu_custom_call.1} parent=35 // pred_check_branch
          %247 = sbr.rel (%p245) target = $region40
        $region39: #{tpu_custom_call.1} parent=35 // pred_region
          %249 = dma.done %s241, 512
        $region40: #{tpu_custom_call.1} parent=35 // pred_fallthru
          _
        %s250 = sand.u32 %s58, 1
        %s251 = scalar_lea.sflag [#allocation6], %s250
        %s252 = sand.u32 %s58, 1
        %s253 = smul.addr %s252, 16
        %s254 = scalar_lea.vmem [#allocation5], %s253
        // Predicated region
        $region41: #{tpu_custom_call.1} parent=35 // pred_check
          %p255 = pneg %p71
        $region42: #{tpu_custom_call.1} parent=35 // pred_check_branch
          %257 = sbr.rel (%p255) target = $region44
        $region43: #{tpu_custom_call.1} parent=35 // pred_region
          %259 = dma.done %s251, 256
        $region44: #{tpu_custom_call.1} parent=35 // pred_fallthru
          _
        %s260 = sand.u32 %s32, 1
        %s261 = scalar_lea.sflag [#allocation3], %s260
        %s262 = sand.u32 %s32, 1
        %s263 = smul.addr %s262, 32
        %s264 = scalar_lea.vmem [#allocation2], %s263
        %p265 = pneg %p45
        %p266 = pneg %p42
        %s267 = sand.u32 %s58, 1
        %s268 = scalar_lea.sflag [#allocation6], %s267
        %s269 = sand.u32 %s58, 1
        %s270 = smul.addr %s269, 16
        %s271 = scalar_lea.vmem [#allocation5], %s270
        %p272 = pneg %p71
        %p273 = pneg %p68
        %p274 = pneg %p92
        %p275 = pneg %p89
        %p276 = pneg %p113
        %p277 = pneg %p110
        %p278 = pneg %p139
        %p279 = pneg %p136
        %s280 = sand.u32 %s126, 1
        %s281 = scalar_lea.sflag [#allocation4], %s280
        %s282 = sand.u32 %s126, 1
        %s283 = smul.addr %s282, 32
        %s284 = scalar_lea.vmem [#allocation7], %s283
        %s285 = smul.u32 2, %s24
        %s286 = smul.u32 2, %s24
        %s287 = smul.u32 2, %s24
        %v288 = vld [vmem:[%s244] sm:$0xff]
        %v289 = vld [vmem:[%s244 + $0x8] sm:$0xff]
        %v290 = vld [vmem:[%s244 + $0x10] sm:$0xff]
        %v291 = vld [vmem:[%s244 + $0x18] sm:$0xff]
        %v292 = vld [vmem:[%s254] sm:$0xff]
        %v293 = vld [vmem:[%s254 + $0x8] sm:$0xff]
        %v294 = vadd.f32 %v288, %v292
        %v295 = vadd.f32 %v289, %v293
        %v296 = vadd.f32 %v290, %v292
        %v297 = vadd.f32 %v291, %v293
        %298 = vadd.xlane.f32.xlu0 %v294
        %v299 = vpop.xlane.xlu0 %298
        %300 = vadd.xlane.f32.xlu0 %v295
        %v301 = vpop.xlane.xlu0 %300
        %302 = vadd.xlane.f32.xlu0 %v296
        %v303 = vpop.xlane.xlu0 %302
        %304 = vadd.xlane.f32.xlu0 %v297
        %v305 = vpop.xlane.xlu0 %304
        %v306 = vrcp.pop 128.0
        %v307 = vmul.f32 128.0, %v306
        %v308 = vsub.f32 1.0, %v307
        %v309 = vmul.f32 %v306, %v308
        %v310 = vadd.f32 %v306, %v309
        %vm311 = vweird.f32 %v306
        %v312 = vsel %vm311, %v306, %v310
        %v313 = vmul.f32 %v299, %v312
        %v314 = vmul.f32 %v301, %v312
        %v315 = vmul.f32 %v303, %v312
        %v316 = vmul.f32 %v305, %v312
        %v317 = vsub.f32 %v294, %v313
        %v318 = vsub.f32 %v295, %v314
        %v319 = vsub.f32 %v296, %v315
        %v320 = vsub.f32 %v297, %v316
        %v321 = vmul.f32 %v317, %v317
        %v322 = vmul.f32 %v318, %v318
        %v323 = vmul.f32 %v319, %v319
        %v324 = vmul.f32 %v320, %v320
        %325 = vadd.xlane.f32.xlu0 %v321
        %v326 = vpop.xlane.xlu0 %325
        %327 = vadd.xlane.f32.xlu0 %v322
        %v328 = vpop.xlane.xlu0 %327
        %329 = vadd.xlane.f32.xlu0 %v323
        %v330 = vpop.xlane.xlu0 %329
        %331 = vadd.xlane.f32.xlu0 %v324
        %v332 = vpop.xlane.xlu0 %331
        %v333 = vmul.f32 %v326, %v312
        %v334 = vmul.f32 %v328, %v312
        %v335 = vmul.f32 %v330, %v312
        %v336 = vmul.f32 %v332, %v312
        %v337 = vadd.f32 %v333, 1e-12
        %v338 = vadd.f32 %v334, 1e-12
        %v339 = vadd.f32 %v335, 1e-12
        %v340 = vadd.f32 %v336, 1e-12
        %v341 = vrsqrt.pop %v337
        %v342 = vmul.f32 %v341, %v337
        %v343 = vmul.f32 %v342, %v341
        %v344 = vmul.f32 0.5, %v343
        %v345 = vsub.f32 1.5, %v344
        %v346 = vmul.f32 %v341, %v345
        %vm347 = vweird.f32 %v337
        %vm348 = vweird.f32 %v341
        %vm349 = vmor %vm347, %vm348
        %v350 = vsel %vm349, %v341, %v346
        %v351 = vrsqrt.pop %v338
        %v352 = vmul.f32 %v351, %v338
        %v353 = vmul.f32 %v352, %v351
        %v354 = vmul.f32 0.5, %v353
        %v355 = vsub.f32 1.5, %v354
        %v356 = vmul.f32 %v351, %v355
        %vm357 = vweird.f32 %v338
        %vm358 = vweird.f32 %v351
        %vm359 = vmor %vm357, %vm358
        %v360 = vsel %vm359, %v351, %v356
        %v361 = vrsqrt.pop %v339
        %v362 = vmul.f32 %v361, %v339
        %v363 = vmul.f32 %v362, %v361
        %v364 = vmul.f32 0.5, %v363
        %v365 = vsub.f32 1.5, %v364
        %v366 = vmul.f32 %v361, %v365
        %vm367 = vweird.f32 %v339
        %vm368 = vweird.f32 %v361
        %vm369 = vmor %vm367, %vm368
        %v370 = vsel %vm369, %v361, %v366
        %v371 = vrsqrt.pop %v340
        %v372 = vmul.f32 %v371, %v340
        %v373 = vmul.f32 %v372, %v371
        %v374 = vmul.f32 0.5, %v373
        %v375 = vsub.f32 1.5, %v374
        %v376 = vmul.f32 %v371, %v375
        %vm377 = vweird.f32 %v340
        %vm378 = vweird.f32 %v371
        %vm379 = vmor %vm377, %vm378
        %v380 = vsel %vm379, %v371, %v376
        %v381 = vmul.f32 %v317, %v350
        %v382 = vmul.f32 %v318, %v360
        %v383 = vmul.f32 %v319, %v370
        %v384 = vmul.f32 %v320, %v380
        %v385 = vld [vmem:[%s2] sm:$0x1]
        %v387 = vperm.slane %v385, 0
        %v389 = vmul.f32 %v381, %v387
        %v390 = vmul.f32 %v382, %v387
        %v391 = vmul.f32 %v383, %v387
        %v392 = vmul.f32 %v384, %v387
        %v393 = vld [vmem:[%s3] sm:$0x1]
        %v395 = vperm.slane %v393, 0
        %v397 = vadd.f32 %v389, %v395
        %v398 = vadd.f32 %v390, %v395
        %v399 = vadd.f32 %v391, %v395
        %v400 = vadd.f32 %v392, %v395
        %401 = vst [vmem:[%s284] sm:$0xff] %v397
        %402 = vst [vmem:[%s284 + $0x8] sm:$0xff] %v398
        %403 = vst [vmem:[%s284 + $0x10] sm:$0xff] %v399
        %404 = vst [vmem:[%s284 + $0x18] sm:$0xff] %v400
        %s405 = sand.u32 %s126, 1
        %s406 = scalar_lea.sflag [#allocation4], %s405
        %s407 = sand.u32 %s126, 1
        %s408 = smul.addr %s407, 32
        %s409 = scalar_lea.vmem [#allocation7], %s408
        // Predicated region
        $region45: #{tpu_custom_call.1} parent=35 // pred_check
          %p410 = pneg %p136
        $region46: #{tpu_custom_call.1} parent=35 // pred_check_branch
          %412 = sbr.rel (%p410) target = $region48
        $region47: #{tpu_custom_call.1} parent=35 // pred_region
          #allocation11 [shape = 'u32[6]{0}', space=smem, size = 0x18, scoped, tag = 'DMA stride descriptor']
          %s413 = smul.u32 2, %s24
          %415 = vsyncadd %s406, 0
          %s416 = smul.addr %s413, 8
          %s417 = scalar_lea.hbm %s4, %s416
          %s419 = sshll.u32 1, 14
          %s420 = sxor.u32 4294967295, %s419
          %s423 = sshll.u32 7, 18
          %s424 = sxor.u32 4294967295, %s423
          %s425 = sand.u32 0, %s424
          %s427 = sor.u32 %s425, 0
          %s428 = sshll.u32 %s409, 4
          %s429 = int_to_ptr.vmem [resolvable:$true] %s428
          %s430 = sshll.u32 %s417, 4
          %s431 = int_to_ptr.hbm [resolvable:$true] %s430
          %437 = sst [smem:[#allocation11]] 256
          %s438 = scalar_lea.smem [#allocation11], 1
          %439 = sst [smem:[%s438]] 512
          %s440 = scalar_lea.smem [#allocation11], 2
          %441 = sst [smem:[%s440]] 2
          %s442 = scalar_lea.smem [#allocation11], 3
          %443 = sst [smem:[%s442]] 128
          %s444 = scalar_lea.smem [#allocation11], 4
          %445 = sst [smem:[%s444]] 128
          %s446 = scalar_lea.smem [#allocation11], 5
          %447 = sst [smem:[%s446]] 8
          %449 = dma.general %s429, 512, %s431, %s406, [#allocation10], [#allocation11], %s427, 0
        $region48: #{tpu_custom_call.1} parent=35 // pred_fallthru
          _
      $region36: #{tpu_custom_call.1} parent=5 // pred_fallthru
        _
      %p450 = scmp.le.s32.totalorder 2, %s19
      // Predicated region
      $region49: #{tpu_custom_call.1} parent=5 // pred_check
        %p451 = pneg %p450
      $region50: #{tpu_custom_call.1} parent=5 // pred_check_branch
        %453 = sbr.rel (%p451) target = $region52
      $region51: #{tpu_custom_call.1} parent=5 // pred_region
        %s454 = ssub.s32 %s19, 2
        // Predicated region
        $region53: #{tpu_custom_call.1} parent=51 // pred_check
          %p455 = pneg %p142
        $region54: #{tpu_custom_call.1} parent=51 // pred_check_branch
          %457 = sbr.rel (%p455) target = $region56
        $region55: #{tpu_custom_call.1} parent=51 // pred_region
          %s458 = sand.u32 %s127, 1
          %s459 = scalar_lea.sflag [#allocation4], %s458
          %s460 = sand.u32 %s127, 1
          %s461 = smul.addr %s460, 32
          %s462 = scalar_lea.vmem [#allocation7], %s461
          %464 = dma.done %s459, 512
        $region56: #{tpu_custom_call.1} parent=51 // pred_fallthru
          _
      $region52: #{tpu_custom_call.1} parent=5 // pred_fallthru
        _
    $region6: #{tpu_custom_call.1} parent=1 // loop_footer
      %s23 = sadd.s32 1, %s19
    $region7: #{tpu_custom_call.1} parent=1 // loop_footer_branch
      %18 = sbr.rel target = $region3
    $region8: #{tpu_custom_call.1} parent=1 // loop_exit
      _
    %465 = vsyncpa [#allocation3], 1
    %s466 = scalar_lea.sflag [#allocation3], 1
    %467 = vsyncpa %s466, 1
    %468 = vsyncpa [#allocation6], 1
    %s469 = scalar_lea.sflag [#allocation6], 1
    %470 = vsyncpa %s469, 1
    %471 = vsyncpa [#allocation4], 1
    %s472 = scalar_lea.sflag [#allocation4], 1
    %473 = vsyncpa %s472, 1

</llo_original>
